<compile_context>
chip_gen: v7x
topology: tpu7x:2x2x1
jax: 0.10.0
libtpu: 0.0.40
codegen_flags: <defaults>
</compile_context>

<pallas_src>
import functools

import numpy as np
import jax
import jax.numpy as jnp
from jax import lax
from jax.experimental import pallas as pl
from jax.experimental.pallas import tpu as pltpu


def _round_up(x, m):
    return (x + m - 1) // m * m


def _pick_lane_tile(P, max_lane_tile):
    """Choose (tpl, P8, pad) with P + pad == 8 * P8 and tpl | P8.

    Prefers a pad-free, lane-dense (multiple-of-128) tile when H*W permits;
    falls back to padding the pixel axis otherwise.
    """
    max_lane_tile = max(128, (max_lane_tile // 128) * 128)
    if P % 8 == 0:
        P8 = P // 8
        if P8 % 128 == 0:
            # Largest multiple-of-128 divisor of P8 that fits max_lane_tile.
            for t in range(min(max_lane_tile, P8), 127, -128):
                if P8 % t == 0:
                    return t, P8, 0
    # Fallback: pad the pixel axis so it tiles evenly (lane-dense blocks).
    # TODO(synk): handle the ragged tail in-kernel to avoid the pad/crop copies.
    tpl = min(max_lane_tile, _round_up(-(-P // 8), 128))
    P_pad = _round_up(P, 8 * tpl)
    return tpl, P_pad // 8, P_pad - P


def _flow2depth_kernel(params_ref, static_ref, flow_ref, out_ref, *, chunk):
    # params_ref: (B, 12) SMEM   rows of K@R flattened (9) then K@T (3)
    # static_ref: (5, 8, TPL)    rows: pixel_dir x/y/z, pixel_loc x/y
    # flow_ref  : (1, 2, 8, TPL)
    # out_ref   : (1, 8, 8, TPL)
    b = pl.program_id(1)
    tpl = static_ref.shape[-1]
    n_chunks = tpl // chunk

    # Per-batch scalars from SMEM (read once per grid step).
    k00 = params_ref[b, 0]; k01 = params_ref[b, 1]; k02 = params_ref[b, 2]
    k10 = params_ref[b, 3]; k11 = params_ref[b, 4]; k12 = params_ref[b, 5]
    k20 = params_ref[b, 6]; k21 = params_ref[b, 7]; k22 = params_ref[b, 8]

    # Rows 3-5 are pure broadcasts of K@T; hoist the splats out of the loop.
    row3 = jnp.full((8, chunk), params_ref[b, 9], dtype=jnp.float32)
    row4 = jnp.full((8, chunk), params_ref[b, 10], dtype=jnp.float32)
    row5 = jnp.full((8, chunk), params_ref[b, 11], dtype=jnp.float32)

    def body(c, carry):
        start = c * chunk
        if not isinstance(start, int):
            start = pl.multiple_of(start, chunk)
        sl = pl.ds(start, chunk)

        pd0 = static_ref[0, :, sl]          # (8, chunk)
        pd1 = static_ref[1, :, sl]
        pd2 = static_ref[2, :, sl]

        # rows 0-2: (K @ R) @ pixel_dir  (scalar-broadcast FMAs on the VPU)
        out_ref[0, 0, :, sl] = k00 * pd0 + k01 * pd1 + k02 * pd2
        out_ref[0, 1, :, sl] = k10 * pd0 + k11 * pd1 + k12 * pd2
        out_ref[0, 2, :, sl] = k20 * pd0 + k21 * pd1 + k22 * pd2

        # rows 3-5: broadcast of K @ T
        out_ref[0, 3, :, sl] = row3
        out_ref[0, 4, :, sl] = row4
        out_ref[0, 5, :, sl] = row5

        # rows 6-7: pixel_loc + flow
        out_ref[0, 6, :, sl] = static_ref[3, :, sl] + flow_ref[0, 0, :, sl]
        out_ref[0, 7, :, sl] = static_ref[4, :, sl] + flow_ref[0, 1, :, sl]
        return carry

    if n_chunks == 1:
        body(0, 0)
    else:
        lax.fori_loop(0, n_chunks, body, 0)


class Flow2Depth:
    """JAX/Pallas port of the PyTorch Flow2Depth module (forward pass)."""

    def __init__(self, H, W, *, max_lane_tile=8192):
        self.H, self.W = H, W
        P = H * W
        self.P = P

        # --- constants, float64 math then f32 cast (matches the PyTorch module) ---
        K = np.zeros((3, 3))
        K[0, 0] = 0.89115971 * W
        K[0, 2] = 0.5 * W
        K[1, 1] = 1.18821287 * H
        K[1, 2] = 0.5 * H
        K[2, 2] = 1.0
        Ki = np.linalg.inv(K)
        jj, ii = np.meshgrid(np.arange(W), np.arange(H))         # pixel p = i*W + j
        homog = np.stack([jj, ii, np.ones_like(ii)], -1).reshape(-1, 3)   # (P, 3)
        self.pixel_dir = (homog @ Ki.T).astype(np.float32)        # (P, 3) = Ki @ [j,i,1]
        self.pixel_loc = np.stack([jj, ii], -1).reshape(-1, 2).astype(np.float32)  # (P, 2)
        self.K = jnp.asarray(K.astype(np.float32))                # (3, 3)

        # --- tiling & the cached static operand (built once per (H, W)) ---
        tpl, P8, pad = _pick_lane_tile(P, max_lane_tile)
        self.tpl, self.P8, self.pad = tpl, P8, pad
        self.n_p = P8 // tpl

        static = np.concatenate([self.pixel_dir.T, self.pixel_loc.T], axis=0)  # (5, P)
        if pad:
            static = np.pad(static, ((0, 0), (0, pad)))
        self.static = jnp.asarray(static.reshape(5, 8, P8).astype(np.float32))

        # Inner lane chunk: bounds vreg live ranges regardless of TPL.
        chunk = 512
        while tpl % chunk:
            chunk //= 2
        self.chunk = chunk

    def __call__(self, R, T, initial_flow):
        B, _, H, W = initial_flow.shape
        assert (H, W) == (self.H, self.W)
        P, P8, tpl, pad, n_p = self.P, self.P8, self.tpl, self.pad, self.n_p

        # Tiny per-batch parameter setup (3x3 matmuls): params[b] = [K@R[b] (9), K@T[b] (3)].
        KR = jnp.matmul(self.K[None], R)                 # (B, 3, 3)
        KT = jnp.matmul(self.K[None], T)[..., 0]         # (B, 3)
        params = jnp.concatenate([KR.reshape(B, 9), KT], axis=1).astype(jnp.float32)

        flow = initial_flow.reshape(B, 2, P)
        if pad:
            flow = jnp.pad(flow, ((0, 0), (0, 0), (0, pad)))
        flow = flow.reshape(B, 2, 8, P8)

        cost = pl.CostEstimate(
            flops=17 * B * P,
            transcendentals=0,
            bytes_accessed=4 * (params.size + self.static.size + flow.size
                                + B * 8 * 8 * P8),
        )

        out = pl.pallas_call(
            functools.partial(_flow2depth_kernel, chunk=self.chunk),
            out_shape=jax.ShapeDtypeStruct((B, 8, 8, P8), jnp.float32),
            grid_spec=pltpu.PrefetchScalarGridSpec(
                num_scalar_prefetch=0,
                # Batch innermost: the static tile is DMA'd once per pixel tile
                # and reused across all batches.
                grid=(n_p, B),
                in_specs=[
                    pl.BlockSpec(memory_space=pltpu.MemorySpace.SMEM),        # params (B,12)
                    pl.BlockSpec((5, 8, tpl), lambda p, b: (0, 0, p)),        # static
                    pl.BlockSpec((1, 2, 8, tpl), lambda p, b: (b, 0, 0, p)),  # flow
                ],
                out_specs=pl.BlockSpec((1, 8, 8, tpl), lambda p, b: (b, 0, 0, p)),
            ),
            compiler_params=pltpu.CompilerParams(
                dimension_semantics=("parallel", "parallel")),
            cost_estimate=cost,
        )(params, self.static, flow)

        out = out.reshape(B, 8, 8 * P8)
        if pad:
            out = out[:, :, :P]
        return out.reshape(B, 8, H, W)


def flow2depth_ref(mod, R, T, initial_flow):
    """Pure-JAX reference mirroring the PyTorch forward exactly."""
    B, _, H, W = initial_flow.shape
    P = H * W
    KR = jnp.matmul(mod.K[None], R)                                    # (B, 3, 3)
    first = jnp.einsum('bce,pe->bpc', KR, jnp.asarray(mod.pixel_dir))  # (B, P, 3)
    second = jnp.matmul(mod.K[None], T)[..., 0][:, None, :]            # (B, 1, 3)
    second = jnp.broadcast_to(second, (B, P, 3))
    flow = initial_flow.transpose(0, 2, 3, 1).reshape(B, P, 2)
    fp = jnp.asarray(mod.pixel_loc)[None] + flow
    tri = jnp.concatenate([first, second, fp], axis=2)                 # (B, P, 8)
    return tri.transpose(0, 2, 1).reshape(B, 8, H, W)


if __name__ == "__main__":
    # Three small configs exercising: (1) pad-free lane-dense single tile,
    # (2) padded fallback + multi-chunk inner loop, (3) multiple pixel tiles.
    cases = [
        (2, 16, 64, 8192),   # P8 = 128, pad = 0, n_p = 1
        (2, 24, 96, 8192),   # P8 not a multiple of 128 -> padded fallback
        (2, 32, 128, 128),   # forced tiny tile -> n_p = 4 (grid index maps)
    ]
    for (B, H, W, mlt) in cases:
        key = jax.random.PRNGKey(0)
        k_r, k_t, k_f = jax.random.split(key, 3)
        R = jax.random.normal(k_r, (B, 3, 3), dtype=jnp.float32)
        T = jax.random.normal(k_t, (B, 3, 1), dtype=jnp.float32)
        initial_flow = jax.random.normal(k_f, (B, 2, H, W), dtype=jnp.float32)

        mod = Flow2Depth(H, W, max_lane_tile=mlt)
        out = jax.block_until_ready(mod(R, T, initial_flow))
        ref = flow2depth_ref(mod, R, T, initial_flow)

        assert out.shape == (B, 8, H, W)
        np.testing.assert_allclose(np.asarray(out), np.asarray(ref),
                                   rtol=1e-4, atol=1e-4)

    print("KERNEL_OK")
</pallas_src>

<mosaic_0001>
module attributes {stable_mosaic.version = 11 : i64} {
  func.func @_flow2depth_kernel(%arg0: i32, %arg1: i32, %arg2: memref<2x12xf32, #tpu.memory_space<smem>>, %arg3: memref<5x8x128xf32, #tpu.memory_space<vmem>>, %arg4: memref<1x2x8x128xf32, #tpu.memory_space<vmem>>, %arg5: memref<1x8x8x128xf32, #tpu.memory_space<vmem>>) attributes {dimension_semantics = [#tpu.dimension_semantics<parallel>, #tpu.dimension_semantics<parallel>], iteration_bounds = array<i64: 1, 2>, scalar_prefetch = 0 : i64, scratch_operands = 0 : i64, tpu.core_type = #tpu.core_type<tc>, window_params = [{transform_indices = @transform_0, window_bounds = array<i64: 2, 12>}, {transform_indices = @transform_1, window_bounds = array<i64: 5, 8, 128>}, {transform_indices = @transform_2, window_bounds = array<i64: 1, 2, 8, 128>}, {transform_indices = @transform_3, window_bounds = array<i64: 1, 8, 8, 128>}]} {
    %0 = arith.index_cast %arg1 : i32 to index
    %c0 = arith.constant 0 : index
    %1 = memref.load %arg2[%0, %c0] : memref<2x12xf32, #tpu.memory_space<smem>>
    %2 = arith.index_cast %arg1 : i32 to index
    %c1 = arith.constant 1 : index
    %3 = memref.load %arg2[%2, %c1] : memref<2x12xf32, #tpu.memory_space<smem>>
    %4 = arith.index_cast %arg1 : i32 to index
    %c2 = arith.constant 2 : index
    %5 = memref.load %arg2[%4, %c2] : memref<2x12xf32, #tpu.memory_space<smem>>
    %6 = arith.index_cast %arg1 : i32 to index
    %c3 = arith.constant 3 : index
    %7 = memref.load %arg2[%6, %c3] : memref<2x12xf32, #tpu.memory_space<smem>>
    %8 = arith.index_cast %arg1 : i32 to index
    %c4 = arith.constant 4 : index
    %9 = memref.load %arg2[%8, %c4] : memref<2x12xf32, #tpu.memory_space<smem>>
    %10 = arith.index_cast %arg1 : i32 to index
    %c5 = arith.constant 5 : index
    %11 = memref.load %arg2[%10, %c5] : memref<2x12xf32, #tpu.memory_space<smem>>
    %12 = arith.index_cast %arg1 : i32 to index
    %c6 = arith.constant 6 : index
    %13 = memref.load %arg2[%12, %c6] : memref<2x12xf32, #tpu.memory_space<smem>>
    %14 = arith.index_cast %arg1 : i32 to index
    %c7 = arith.constant 7 : index
    %15 = memref.load %arg2[%14, %c7] : memref<2x12xf32, #tpu.memory_space<smem>>
    %16 = arith.index_cast %arg1 : i32 to index
    %c8 = arith.constant 8 : index
    %17 = memref.load %arg2[%16, %c8] : memref<2x12xf32, #tpu.memory_space<smem>>
    %18 = arith.index_cast %arg1 : i32 to index
    %c9 = arith.constant 9 : index
    %19 = memref.load %arg2[%18, %c9] : memref<2x12xf32, #tpu.memory_space<smem>>
    %20 = vector.broadcast %19 : f32 to vector<8x128xf32>
    %21 = arith.index_cast %arg1 : i32 to index
    %c10 = arith.constant 10 : index
    %22 = memref.load %arg2[%21, %c10] : memref<2x12xf32, #tpu.memory_space<smem>>
    %23 = vector.broadcast %22 : f32 to vector<8x128xf32>
    %24 = arith.index_cast %arg1 : i32 to index
    %c11 = arith.constant 11 : index
    %25 = memref.load %arg2[%24, %c11] : memref<2x12xf32, #tpu.memory_space<smem>>
    %26 = vector.broadcast %25 : f32 to vector<8x128xf32>
    %c0_0 = arith.constant 0 : index
    %c0_1 = arith.constant 0 : index
    %c0_2 = arith.constant 0 : index
    %27 = vector.load %arg3[%c0_0, %c0_1, %c0_2] : memref<5x8x128xf32, #tpu.memory_space<vmem>>, vector<1x8x128xf32>
    %28 = vector.shape_cast %27 : vector<1x8x128xf32> to vector<8x128xf32>
    %c1_3 = arith.constant 1 : index
    %c0_4 = arith.constant 0 : index
    %c0_5 = arith.constant 0 : index
    %29 = vector.load %arg3[%c1_3, %c0_4, %c0_5] : memref<5x8x128xf32, #tpu.memory_space<vmem>>, vector<1x8x128xf32>
    %30 = vector.shape_cast %29 : vector<1x8x128xf32> to vector<8x128xf32>
    %c2_6 = arith.constant 2 : index
    %c0_7 = arith.constant 0 : index
    %c0_8 = arith.constant 0 : index
    %31 = vector.load %arg3[%c2_6, %c0_7, %c0_8] : memref<5x8x128xf32, #tpu.memory_space<vmem>>, vector<1x8x128xf32>
    %32 = vector.shape_cast %31 : vector<1x8x128xf32> to vector<8x128xf32>
    %33 = vector.broadcast %1 : f32 to vector<8x128xf32>
    %34 = arith.mulf %33, %28 : vector<8x128xf32>
    %35 = vector.broadcast %3 : f32 to vector<8x128xf32>
    %36 = arith.mulf %35, %30 : vector<8x128xf32>
    %37 = arith.addf %34, %36 : vector<8x128xf32>
    %38 = vector.broadcast %5 : f32 to vector<8x128xf32>
    %39 = arith.mulf %38, %32 : vector<8x128xf32>
    %40 = arith.addf %37, %39 : vector<8x128xf32>
    %c0_9 = arith.constant 0 : index
    %c0_10 = arith.constant 0 : index
    %c0_11 = arith.constant 0 : index
    %c0_12 = arith.constant 0 : index
    %41 = vector.load %arg5[%c0_9, %c0_10, %c0_11, %c0_12] : memref<1x8x8x128xf32, #tpu.memory_space<vmem>>, vector<1x1x8x128xf32>
    %42 = vector.shape_cast %41 : vector<1x1x8x128xf32> to vector<8x128xf32>
    %43 = vector.shape_cast %40 : vector<8x128xf32> to vector<1x1x8x128xf32>
    tpu.vector_store %arg5[%c0_9, %c0_10, %c0_11, %c0_12], %43 {strides = array<i32>} : memref<1x8x8x128xf32, #tpu.memory_space<vmem>>, vector<1x1x8x128xf32>,
    %44 = vector.broadcast %7 : f32 to vector<8x128xf32>
    %45 = arith.mulf %44, %28 : vector<8x128xf32>
    %46 = vector.broadcast %9 : f32 to vector<8x128xf32>
    %47 = arith.mulf %46, %30 : vector<8x128xf32>
    %48 = arith.addf %45, %47 : vector<8x128xf32>
    %49 = vector.broadcast %11 : f32 to vector<8x128xf32>
    %50 = arith.mulf %49, %32 : vector<8x128xf32>
    %51 = arith.addf %48, %50 : vector<8x128xf32>
    %c0_13 = arith.constant 0 : index
    %c1_14 = arith.constant 1 : index
    %c0_15 = arith.constant 0 : index
    %c0_16 = arith.constant 0 : index
    %52 = vector.load %arg5[%c0_13, %c1_14, %c0_15, %c0_16] : memref<1x8x8x128xf32, #tpu.memory_space<vmem>>, vector<1x1x8x128xf32>
    %53 = vector.shape_cast %52 : vector<1x1x8x128xf32> to vector<8x128xf32>
    %54 = vector.shape_cast %51 : vector<8x128xf32> to vector<1x1x8x128xf32>
    tpu.vector_store %arg5[%c0_13, %c1_14, %c0_15, %c0_16], %54 {strides = array<i32>} : memref<1x8x8x128xf32, #tpu.memory_space<vmem>>, vector<1x1x8x128xf32>,
    %55 = vector.broadcast %13 : f32 to vector<8x128xf32>
    %56 = arith.mulf %55, %28 : vector<8x128xf32>
    %57 = vector.broadcast %15 : f32 to vector<8x128xf32>
    %58 = arith.mulf %57, %30 : vector<8x128xf32>
    %59 = arith.addf %56, %58 : vector<8x128xf32>
    %60 = vector.broadcast %17 : f32 to vector<8x128xf32>
    %61 = arith.mulf %60, %32 : vector<8x128xf32>
    %62 = arith.addf %59, %61 : vector<8x128xf32>
    %c0_17 = arith.constant 0 : index
    %c2_18 = arith.constant 2 : index
    %c0_19 = arith.constant 0 : index
    %c0_20 = arith.constant 0 : index
    %63 = vector.load %arg5[%c0_17, %c2_18, %c0_19, %c0_20] : memref<1x8x8x128xf32, #tpu.memory_space<vmem>>, vector<1x1x8x128xf32>
    %64 = vector.shape_cast %63 : vector<1x1x8x128xf32> to vector<8x128xf32>
    %65 = vector.shape_cast %62 : vector<8x128xf32> to vector<1x1x8x128xf32>
    tpu.vector_store %arg5[%c0_17, %c2_18, %c0_19, %c0_20], %65 {strides = array<i32>} : memref<1x8x8x128xf32, #tpu.memory_space<vmem>>, vector<1x1x8x128xf32>,
    %c0_21 = arith.constant 0 : index
    %c3_22 = arith.constant 3 : index
    %c0_23 = arith.constant 0 : index
    %c0_24 = arith.constant 0 : index
    %66 = vector.load %arg5[%c0_21, %c3_22, %c0_23, %c0_24] : memref<1x8x8x128xf32, #tpu.memory_space<vmem>>, vector<1x1x8x128xf32>
    %67 = vector.shape_cast %66 : vector<1x1x8x128xf32> to vector<8x128xf32>
    %68 = vector.shape_cast %20 : vector<8x128xf32> to vector<1x1x8x128xf32>
    tpu.vector_store %arg5[%c0_21, %c3_22, %c0_23, %c0_24], %68 {strides = array<i32>} : memref<1x8x8x128xf32, #tpu.memory_space<vmem>>, vector<1x1x8x128xf32>,
    %c0_25 = arith.constant 0 : index
    %c4_26 = arith.constant 4 : index
    %c0_27 = arith.constant 0 : index
    %c0_28 = arith.constant 0 : index
    %69 = vector.load %arg5[%c0_25, %c4_26, %c0_27, %c0_28] : memref<1x8x8x128xf32, #tpu.memory_space<vmem>>, vector<1x1x8x128xf32>
    %70 = vector.shape_cast %69 : vector<1x1x8x128xf32> to vector<8x128xf32>
    %71 = vector.shape_cast %23 : vector<8x128xf32> to vector<1x1x8x128xf32>
    tpu.vector_store %arg5[%c0_25, %c4_26, %c0_27, %c0_28], %71 {strides = array<i32>} : memref<1x8x8x128xf32, #tpu.memory_space<vmem>>, vector<1x1x8x128xf32>,
    %c0_29 = arith.constant 0 : index
    %c5_30 = arith.constant 5 : index
    %c0_31 = arith.constant 0 : index
    %c0_32 = arith.constant 0 : index
    %72 = vector.load %arg5[%c0_29, %c5_30, %c0_31, %c0_32] : memref<1x8x8x128xf32, #tpu.memory_space<vmem>>, vector<1x1x8x128xf32>
    %73 = vector.shape_cast %72 : vector<1x1x8x128xf32> to vector<8x128xf32>
    %74 = vector.shape_cast %26 : vector<8x128xf32> to vector<1x1x8x128xf32>
    tpu.vector_store %arg5[%c0_29, %c5_30, %c0_31, %c0_32], %74 {strides = array<i32>} : memref<1x8x8x128xf32, #tpu.memory_space<vmem>>, vector<1x1x8x128xf32>,
    %c3_33 = arith.constant 3 : index
    %c0_34 = arith.constant 0 : index
    %c0_35 = arith.constant 0 : index
    %75 = vector.load %arg3[%c3_33, %c0_34, %c0_35] : memref<5x8x128xf32, #tpu.memory_space<vmem>>, vector<1x8x128xf32>
    %76 = vector.shape_cast %75 : vector<1x8x128xf32> to vector<8x128xf32>
    %c0_36 = arith.constant 0 : index
    %c0_37 = arith.constant 0 : index
    %c0_38 = arith.constant 0 : index
    %c0_39 = arith.constant 0 : index
    %77 = vector.load %arg4[%c0_36, %c0_37, %c0_38, %c0_39] : memref<1x2x8x128xf32, #tpu.memory_space<vmem>>, vector<1x1x8x128xf32>
    %78 = vector.shape_cast %77 : vector<1x1x8x128xf32> to vector<8x128xf32>
    %79 = arith.addf %76, %78 : vector<8x128xf32>
    %c0_40 = arith.constant 0 : index
    %c6_41 = arith.constant 6 : index
    %c0_42 = arith.constant 0 : index
    %c0_43 = arith.constant 0 : index
    %80 = vector.load %arg5[%c0_40, %c6_41, %c0_42, %c0_43] : memref<1x8x8x128xf32, #tpu.memory_space<vmem>>, vector<1x1x8x128xf32>
    %81 = vector.shape_cast %80 : vector<1x1x8x128xf32> to vector<8x128xf32>
    %82 = vector.shape_cast %79 : vector<8x128xf32> to vector<1x1x8x128xf32>
    tpu.vector_store %arg5[%c0_40, %c6_41, %c0_42, %c0_43], %82 {strides = array<i32>} : memref<1x8x8x128xf32, #tpu.memory_space<vmem>>, vector<1x1x8x128xf32>,
    %c4_44 = arith.constant 4 : index
    %c0_45 = arith.constant 0 : index
    %c0_46 = arith.constant 0 : index
    %83 = vector.load %arg3[%c4_44, %c0_45, %c0_46] : memref<5x8x128xf32, #tpu.memory_space<vmem>>, vector<1x8x128xf32>
    %84 = vector.shape_cast %83 : vector<1x8x128xf32> to vector<8x128xf32>
    %c0_47 = arith.constant 0 : index
    %c1_48 = arith.constant 1 : index
    %c0_49 = arith.constant 0 : index
    %c0_50 = arith.constant 0 : index
    %85 = vector.load %arg4[%c0_47, %c1_48, %c0_49, %c0_50] : memref<1x2x8x128xf32, #tpu.memory_space<vmem>>, vector<1x1x8x128xf32>
    %86 = vector.shape_cast %85 : vector<1x1x8x128xf32> to vector<8x128xf32>
    %87 = arith.addf %84, %86 : vector<8x128xf32>
    %c0_51 = arith.constant 0 : index
    %c7_52 = arith.constant 7 : index
    %c0_53 = arith.constant 0 : index
    %c0_54 = arith.constant 0 : index
    %88 = vector.load %arg5[%c0_51, %c7_52, %c0_53, %c0_54] : memref<1x8x8x128xf32, #tpu.memory_space<vmem>>, vector<1x1x8x128xf32>
    %89 = vector.shape_cast %88 : vector<1x1x8x128xf32> to vector<8x128xf32>
    %90 = vector.shape_cast %87 : vector<8x128xf32> to vector<1x1x8x128xf32>
    tpu.vector_store %arg5[%c0_51, %c7_52, %c0_53, %c0_54], %90 {strides = array<i32>} : memref<1x8x8x128xf32, #tpu.memory_space<vmem>>, vector<1x1x8x128xf32>,
    return
  }
  func.func @transform_0(%arg0: i32, %arg1: i32) -> (i32, i32) {
    %c0_i32 = arith.constant 0 : i32
    %c0_i32_0 = arith.constant 0 : i32
    %c0_i32_1 = arith.constant 0 : i32
    return %c0_i32, %c0_i32_0 : i32, i32
  }
  func.func @transform_1(%arg0: i32, %arg1: i32) -> (i32, i32, i32) {
    %c0_i32 = arith.constant 0 : i32
    %c0_i32_0 = arith.constant 0 : i32
    %c0_i32_1 = arith.constant 0 : i32
    return %c0_i32, %c0_i32_0, %arg0 : i32, i32, i32
  }
  func.func @transform_2(%arg0: i32, %arg1: i32) -> (i32, i32, i32, i32) {
    %c0_i32 = arith.constant 0 : i32
    %c0_i32_0 = arith.constant 0 : i32
    %c0_i32_1 = arith.constant 0 : i32
    return %arg1, %c0_i32, %c0_i32_0, %arg0 : i32, i32, i32, i32
  }
  func.func @transform_3(%arg0: i32, %arg1: i32) -> (i32, i32, i32, i32) {
    %c0_i32 = arith.constant 0 : i32
    %c0_i32_0 = arith.constant 0 : i32
    %c0_i32_1 = arith.constant 0 : i32
    return %arg1, %c0_i32, %c0_i32_0, %arg0 : i32, i32, i32, i32
  }
}

</mosaic_0001>

<llo_original>
// kernel: tpu_custom_call.1
$region0: #{tpu_custom_call.1}
  #allocation0 [shape = 'u32[]', space=smem, size = 0x4, offset = 0x4, fixed_abs, tag = 'smem constant byte address 0x4 - core index']
  #allocation1 [shape = 'u32[144,128]{1,0:T(1,128)}', space=vmem, size = 0x12000, scoped, tag = 'internal scratch']
  %s0 = inlined_call_operand.hbm [shape: f32[2,12], index: 0, kind: input, shape index: {}]
  %s1 = inlined_call_operand.hbm [shape: f32[5,8,128], index: 1, kind: input, shape index: {}]
  %s2 = inlined_call_operand.hbm [shape: f32[2,2,8,128], index: 2, kind: input, shape index: {}]
  %s3 = inlined_call_operand.hbm [shape: f32[2,8,8,128], index: 3, kind: output, shape index: {}]
  %s4 = sld [smem:[#allocation0]]
  $region57: #{tpu_custom_call.1} parent=0
    _
  %s6 = ssub.s32 1, %s4
  %s7 = scalar_select 0, %s6, %s4
  $region1: #{tpu_custom_call.1} parent=0
    #allocation2 [shape = 'u8[1024]{0}', space=smem, size = 0x400, scoped, tag = 'input window, operand 0, single buffered']
    #allocation3 [shape = 's32[2]{0}', space=sflag, size = 0x8, scoped, tag = 'scoped memory for tpu_custom_call.1']
    #allocation4 [shape = 's32[2]{0}', space=sflag, size = 0x8, scoped, tag = 'scoped memory for tpu_custom_call.1']
    #allocation5 [shape = 's32[2]{0}', space=sflag, size = 0x8, scoped, tag = 'scoped memory for tpu_custom_call.1']
    #allocation6 [shape = 'u8[20480]{0}', space=vmem, size = 0x5000, scoped, tag = 'input window, operand 1, single buffered']
    #allocation7 [shape = 'u8[16384]{0}', space=vmem, size = 0x4000, scoped, tag = 'input window, operand 2']
    #allocation8 [shape = 's32[2]{0}', space=sflag, size = 0x8, scoped, tag = 'scoped memory for tpu_custom_call.1']
    #allocation9 [shape = 'u8[65536]{0}', space=vmem, size = 0x10000, scoped, tag = 'output window, operand 0']
    %8 = vsyncpa [#allocation5], 0
    %9 = vsyncpa [#allocation3], 0
    %10 = vsyncpa [#allocation8], 0
    %s11 = scalar_lea.sflag [#allocation8], 1
    %12 = vsyncpa %s11, 0
    %13 = vsyncpa [#allocation4], 0
    %s14 = scalar_lea.sflag [#allocation4], 1
    %15 = vsyncpa %s14, 0
    loop: start=0, step=1, limit=4
    $region2: #{tpu_custom_call.1} parent=1 // loop_pre_header
      _
    $region3: #{tpu_custom_call.1} parent=1 // loop_header
      %s17 = sphi 0, %s21
      %p18 = scmp.ge.s32.totalorder %s17, 4
      %s24 = sphi 0, %s36
      %s25 = sphi 0, %s32
      %s26 = sphi 0, %s24
      %s27 = sphi 0, %s25
      %s28 = sphi 0, %s26
      %s29 = sphi 0, %s27
      %s37 = sphi 0, %s37
      %s39 = sphi 0, %s37
      %s40 = sphi 0, %s39
      %s54 = sphi 0, %s40
      %s60 = sphi 0, %s62
      %s63 = sphi 0, %s60
      %s64 = sphi 0, %s63
      %s80 = sphi 0, %s64
      %s88 = sphi 0, %s90
      %s91 = sphi 0, %s88
      %s92 = sphi 0, %s91
      %s108 = sphi 0, %s92
      %s116 = sphi 0, %s118
      %s119 = sphi 0, %s116
      %s120 = sphi 0, %s119
      %s136 = sphi 0, %s120
    $region4: #{tpu_custom_call.1} parent=1 // loop_header_branch
      %20 = sbr.rel (%p18) target = $region8
    $region5: #{tpu_custom_call.1} parent=1 // loop_body
      %s22 = ssub.s32 %s17, 1
      %s23 = ssub.s32 %s17, 2
      %s30 = sadd.s32 1, %s25
      %p31 = scmp.ge.s32.totalorder %s30, 2
      %s32 = scalar_select %p31, 0, %s30
      %s33 = sadd.s32 1, %s24
      %s34 = scalar_select %p31, %s33, %s24
      %p35 = scmp.ge.s32.totalorder %s34, 1
      %s36 = scalar_select %p35, 0, %s34
      %s38 = sadd.s32 %s37, 1
      %p41 = scmp.eq.s32.totalorder %s17, 1
      %p42 = scmp.ne.s32.totalorder %s37, %s39
      %p43 = scmp.eq.s32.totalorder %s17, 0
      %p44 = por %p42, %p43
      %p45 = scmp.ne.s32.totalorder %s37, %s39
      %p46 = scmp.eq.s32.totalorder %s22, 1
      %p47 = por %p45, %p46
      %p48 = scmp.ne.s32.totalorder %s39, %s40
      %p49 = scmp.eq.s32.totalorder %s22, 0
      %p50 = por %p48, %p49
      %p51 = scmp.ne.s32.totalorder %s39, %s40
      %p52 = scmp.eq.s32.totalorder %s23, 1
      %p53 = por %p51, %p52
      %p55 = scmp.ne.s32.totalorder %s40, %s54
      %p56 = scmp.eq.s32.totalorder %s23, 0
      %p57 = por %p55, %p56
      %s58 = ssub.s32 %s24, %s36
      %p59 = scmp.eq.s32.totalorder %s58, 0
      %s61 = sadd.s32 %s60, 1
      %s62 = scalar_select %p59, %s60, %s61
      %p65 = pneg %p59
      %p66 = scmp.eq.s32.totalorder %s17, 1
      %p67 = por %p65, %p66
      %p68 = scmp.ne.s32.totalorder %s60, %s63
      %p69 = scmp.eq.s32.totalorder %s17, 0
      %p70 = por %p68, %p69
      %p71 = scmp.ne.s32.totalorder %s60, %s63
      %p72 = scmp.eq.s32.totalorder %s22, 1
      %p73 = por %p71, %p72
      %p74 = scmp.ne.s32.totalorder %s63, %s64
      %p75 = scmp.eq.s32.totalorder %s22, 0
      %p76 = por %p74, %p75
      %p77 = scmp.ne.s32.totalorder %s63, %s64
      %p78 = scmp.eq.s32.totalorder %s23, 1
      %p79 = por %p77, %p78
      %p81 = scmp.ne.s32.totalorder %s64, %s80
      %p82 = scmp.eq.s32.totalorder %s23, 0
      %p83 = por %p81, %p82
      %s84 = ssub.s32 %s25, %s32
      %s85 = ssub.s32 %s24, %s36
      %s86 = sor.u32 %s84, %s85
      %p87 = scmp.eq.s32.totalorder %s86, 0
      %s89 = sadd.s32 %s88, 1
      %s90 = scalar_select %p87, %s88, %s89
      %p93 = pneg %p87
      %p94 = scmp.eq.s32.totalorder %s17, 1
      %p95 = por %p93, %p94
      %p96 = scmp.ne.s32.totalorder %s88, %s91
      %p97 = scmp.eq.s32.totalorder %s17, 0
      %p98 = por %p96, %p97
      %p99 = scmp.ne.s32.totalorder %s88, %s91
      %p100 = scmp.eq.s32.totalorder %s22, 1
      %p101 = por %p99, %p100
      %p102 = scmp.ne.s32.totalorder %s91, %s92
      %p103 = scmp.eq.s32.totalorder %s22, 0
      %p104 = por %p102, %p103
      %p105 = scmp.ne.s32.totalorder %s91, %s92
      %p106 = scmp.eq.s32.totalorder %s23, 1
      %p107 = por %p105, %p106
      %p109 = scmp.ne.s32.totalorder %s92, %s108
      %p110 = scmp.eq.s32.totalorder %s23, 0
      %p111 = por %p109, %p110
      %s112 = ssub.s32 %s25, %s32
      %s113 = ssub.s32 %s24, %s36
      %s114 = sor.u32 %s112, %s113
      %p115 = scmp.eq.s32.totalorder %s114, 0
      %s117 = sadd.s32 %s116, 1
      %s118 = scalar_select %p115, %s116, %s117
      %p121 = pneg %p115
      %p122 = scmp.eq.s32.totalorder %s17, 1
      %p123 = por %p121, %p122
      %p124 = scmp.ne.s32.totalorder %s116, %s119
      %p125 = scmp.eq.s32.totalorder %s17, 0
      %p126 = por %p124, %p125
      %p127 = scmp.ne.s32.totalorder %s116, %s119
      %p128 = scmp.eq.s32.totalorder %s22, 1
      %p129 = por %p127, %p128
      %p130 = scmp.ne.s32.totalorder %s119, %s120
      %p131 = scmp.eq.s32.totalorder %s22, 0
      %p132 = por %p130, %p131
      %p133 = scmp.ne.s32.totalorder %s119, %s120
      %p134 = scmp.eq.s32.totalorder %s23, 1
      %p135 = por %p133, %p134
      %p137 = scmp.ne.s32.totalorder %s120, %s136
      %p138 = scmp.eq.s32.totalorder %s23, 0
      %p139 = por %p137, %p138
      %p140 = scmp.le.s32.totalorder 1, %s17
      %p141 = scmp.lt.s32.totalorder %s17, 3
      %p142 = pnand %p140, %p141
      %p143 = pneg %p142
      // Predicated region
      $region9: #{tpu_custom_call.1} parent=5 // pred_check
        _
      $region10: #{tpu_custom_call.1} parent=5 // pred_check_branch
        %145 = sbr.rel (%p142) target = $region12
      $region11: #{tpu_custom_call.1} parent=5 // pred_region
        %s146 = ssub.s32 %s17, 1
        // Predicated region
        $region13: #{tpu_custom_call.1} parent=11 // pred_check
          %p147 = pneg %p50
        $region14: #{tpu_custom_call.1} parent=11 // pred_check_branch
          %149 = sbr.rel (%p147) target = $region16
        $region15: #{tpu_custom_call.1} parent=11 // pred_region
          %s151 = ssub.s32 32, 32
          %152 = vsyncadd [#allocation5], %s151
          %155 = dma.hbm_to_smem %s0, 32, [#allocation2], [#allocation5]
        $region16: #{tpu_custom_call.1} parent=11 // pred_fallthru
          _
        // Predicated region
        $region17: #{tpu_custom_call.1} parent=11 // pred_check
          %p156 = pneg %p76
        $region18: #{tpu_custom_call.1} parent=11 // pred_check_branch
          %158 = sbr.rel (%p156) target = $region20
        $region19: #{tpu_custom_call.1} parent=11 // pred_region
          %s160 = ssub.s32 640, 640
          %161 = vsyncadd [#allocation3], %s160
          %s162 = smul.addr %s26, 128
          %s163 = scalar_lea.hbm %s1, %s162
          %s164 = sshll.u32 [#allocation6], 4
          %s165 = int_to_ptr.vmem [resolvable:$true] %s164
          %170 = dma.hbm_to_vmem [thread:$0]  %s163, 640, %s165, [#allocation3], 128, 128, 8
        $region20: #{tpu_custom_call.1} parent=11 // pred_fallthru
          _
      $region12: #{tpu_custom_call.1} parent=5 // pred_fallthru
        _
      %p171 = scmp.lt.s32.totalorder %s17, 2
      // Predicated region
      $region21: #{tpu_custom_call.1} parent=5 // pred_check
        %p172 = pneg %p171
      $region22: #{tpu_custom_call.1} parent=5 // pred_check_branch
        %174 = sbr.rel (%p172) target = $region24
      $region23: #{tpu_custom_call.1} parent=5 // pred_region
        // Predicated region
        $region25: #{tpu_custom_call.1} parent=23 // pred_check
          %p175 = pneg %p98
        $region26: #{tpu_custom_call.1} parent=23 // pred_check_branch
          %177 = sbr.rel (%p175) target = $region28
        $region27: #{tpu_custom_call.1} parent=23 // pred_region
          %s178 = sand.u32 %s88, 1
          %s179 = scalar_lea.sflag [#allocation8], %s178
          %s180 = sand.u32 %s88, 1
          %s181 = smul.addr %s180, 16
          %s182 = scalar_lea.vmem [#allocation7], %s181
          %s184 = ssub.s32 256, 256
          %185 = vsyncadd %s179, %s184
          %s186 = smul.addr %s25, 2
          %s187 = sadd.s32 %s24, %s186
          %s188 = smul.addr %s187, 128
          %s189 = scalar_lea.hbm %s2, %s188
          %s190 = sshll.u32 %s182, 4
          %s191 = int_to_ptr.vmem [resolvable:$true] %s190
          %196 = dma.hbm_to_vmem [thread:$0]  %s189, 256, %s191, %s179, 128, 128, 8
        $region28: #{tpu_custom_call.1} parent=23 // pred_fallthru
          _
      $region24: #{tpu_custom_call.1} parent=5 // pred_fallthru
        _
      %p197 = scmp.le.s32.totalorder 1, %s17
      %p198 = scmp.lt.s32.totalorder %s17, 3
      %p199 = pnand %p197, %p198
      %p200 = pneg %p199
      // Predicated region
      $region29: #{tpu_custom_call.1} parent=5 // pred_check
        _
      $region30: #{tpu_custom_call.1} parent=5 // pred_check_branch
        %202 = sbr.rel (%p199) target = $region32
      $region31: #{tpu_custom_call.1} parent=5 // pred_region
        %s203 = ssub.s32 %s17, 1
        // Predicated region
        $region33: #{tpu_custom_call.1} parent=31 // pred_check
          %p204 = pneg %p50
        $region34: #{tpu_custom_call.1} parent=31 // pred_check_branch
          %206 = sbr.rel (%p204) target = $region36
        $region35: #{tpu_custom_call.1} parent=31 // pred_region
          %207 = dma.done [#allocation5], 32
        $region36: #{tpu_custom_call.1} parent=31 // pred_fallthru
          _
        // Predicated region
        $region37: #{tpu_custom_call.1} parent=31 // pred_check
          %p208 = pneg %p76
        $region38: #{tpu_custom_call.1} parent=31 // pred_check_branch
          %210 = sbr.rel (%p208) target = $region40
        $region39: #{tpu_custom_call.1} parent=31 // pred_region
          %211 = dma.done [#allocation3], 640
        $region40: #{tpu_custom_call.1} parent=31 // pred_fallthru
          _
        %s212 = sand.u32 %s91, 1
        %s213 = scalar_lea.sflag [#allocation8], %s212
        %s214 = sand.u32 %s91, 1
        %s215 = smul.addr %s214, 16
        %s216 = scalar_lea.vmem [#allocation7], %s215
        // Predicated region
        $region41: #{tpu_custom_call.1} parent=31 // pred_check
          %p217 = pneg %p104
        $region42: #{tpu_custom_call.1} parent=31 // pred_check_branch
          %219 = sbr.rel (%p217) target = $region44
        $region43: #{tpu_custom_call.1} parent=31 // pred_region
          %220 = dma.done %s213, 256
        $region44: #{tpu_custom_call.1} parent=31 // pred_fallthru
          _
        %221 = sfence
        %p222 = pneg %p50
        %p223 = pneg %p47
        %p224 = pneg %p76
        %p225 = pneg %p73
        %s226 = sand.u32 %s91, 1
        %s227 = scalar_lea.sflag [#allocation8], %s226
        %s228 = sand.u32 %s91, 1
        %s229 = smul.addr %s228, 16
        %s230 = scalar_lea.vmem [#allocation7], %s229
        %p231 = pneg %p104
        %p232 = pneg %p101
        %p233 = pneg %p132
        %p234 = pneg %p129
        %s235 = sand.u32 %s119, 1
        %s236 = scalar_lea.sflag [#allocation4], %s235
        %s237 = sand.u32 %s119, 1
        %s238 = smul.addr %s237, 64
        %s239 = scalar_lea.vmem [#allocation9], %s238
        %s240 = smul.u32 %s27, 128
        %s241 = sld [smem:[#allocation2 + %s240]]
        %s242 = sadd.s32 %s240, 1
        %s243 = sld [smem:[#allocation2 + %s242]]
        %s244 = sadd.s32 %s240, 2
        %s245 = sld [smem:[#allocation2 + %s244]]
        %s246 = sadd.s32 %s240, 3
        %s247 = sld [smem:[#allocation2 + %s246]]
        %s248 = sadd.s32 %s240, 4
        %s249 = sld [smem:[#allocation2 + %s248]]
        %s250 = sadd.s32 %s240, 5
        %s251 = sld [smem:[#allocation2 + %s250]]
        %s252 = sadd.s32 %s240, 6
        %s253 = sld [smem:[#allocation2 + %s252]]
        %s254 = sadd.s32 %s240, 7
        %s255 = sld [smem:[#allocation2 + %s254]]
        %s256 = sadd.s32 %s240, 8
        %s257 = sld [smem:[#allocation2 + %s256]]
        %s258 = sadd.s32 %s240, 9
        %s259 = sld [smem:[#allocation2 + %s258]]
        %s260 = sadd.s32 %s240, 10
        %s261 = sld [smem:[#allocation2 + %s260]]
        %s262 = sadd.s32 %s240, 11
        %s263 = sld [smem:[#allocation2 + %s262]]
        %v264 = vld [vmem:[#allocation6] sm:$0xff]
        %s265 = scalar_lea.vmem [#allocation6], 8
        %v266 = vld [vmem:[%s265] sm:$0xff]
        %s267 = scalar_lea.vmem [#allocation6], 16
        %v268 = vld [vmem:[%s267] sm:$0xff]
        %v269 = vstv %s241
        %v270 = vmul.f32 %v269, %v264
        %v271 = vstv %s243
        %v272 = vmul.f32 %v271, %v266
        %v273 = vadd.f32 %v270, %v272
        %v274 = vstv %s245
        %v275 = vmul.f32 %v274, %v268
        %v276 = vadd.f32 %v273, %v275
        %277 = vst [vmem:[%s239] sm:$0xff] %v276
        %v278 = vstv %s247
        %v279 = vmul.f32 %v278, %v264
        %v280 = vstv %s249
        %v281 = vmul.f32 %v280, %v266
        %v282 = vadd.f32 %v279, %v281
        %v283 = vstv %s251
        %v284 = vmul.f32 %v283, %v268
        %v285 = vadd.f32 %v282, %v284
        %s286 = scalar_lea.vmem %s239, 8 [#allocation9]
        %287 = vst [vmem:[%s286] sm:$0xff] %v285
        %v288 = vstv %s253
        %v289 = vmul.f32 %v288, %v264
        %v290 = vstv %s255
        %v291 = vmul.f32 %v290, %v266
        %v292 = vadd.f32 %v289, %v291
        %v293 = vstv %s257
        %v294 = vmul.f32 %v293, %v268
        %v295 = vadd.f32 %v292, %v294
        %s296 = scalar_lea.vmem %s239, 16 [#allocation9]
        %297 = vst [vmem:[%s296] sm:$0xff] %v295
        %v298 = vstv %s259
        %s299 = scalar_lea.vmem %s239, 24 [#allocation9]
        %300 = vst [vmem:[%s299] sm:$0xff] %v298
        %v301 = vstv %s261
        %s302 = scalar_lea.vmem %s239, 32 [#allocation9]
        %303 = vst [vmem:[%s302] sm:$0xff] %v301
        %v304 = vstv %s263
        %s305 = scalar_lea.vmem %s239, 40 [#allocation9]
        %306 = vst [vmem:[%s305] sm:$0xff] %v304
        %s307 = scalar_lea.vmem [#allocation6], 24
        %v308 = vld [vmem:[%s307] sm:$0xff]
        %v309 = vld [vmem:[%s216] sm:$0xff]
        %v310 = vadd.f32 %v308, %v309
        %s311 = scalar_lea.vmem %s239, 48 [#allocation9]
        %312 = vst [vmem:[%s311] sm:$0xff] %v310
        %s313 = scalar_lea.vmem [#allocation6], 32
        %v314 = vld [vmem:[%s313] sm:$0xff]
        %s315 = scalar_lea.vmem %s216, 8 [#allocation7]
        %v316 = vld [vmem:[%s315] sm:$0xff]
        %v317 = vadd.f32 %v314, %v316
        %s318 = scalar_lea.vmem %s239, 56 [#allocation9]
        %319 = vst [vmem:[%s318] sm:$0xff] %v317
        %s320 = sand.u32 %s119, 1
        %s321 = scalar_lea.sflag [#allocation4], %s320
        %s322 = sand.u32 %s119, 1
        %s323 = smul.addr %s322, 64
        %s324 = scalar_lea.vmem [#allocation9], %s323
        // Predicated region
        $region45: #{tpu_custom_call.1} parent=31 // pred_check
          %p325 = pneg %p129
        $region46: #{tpu_custom_call.1} parent=31 // pred_check_branch
          %327 = sbr.rel (%p325) target = $region48
        $region47: #{tpu_custom_call.1} parent=31 // pred_region
          %s329 = ssub.s32 1024, 1024
          %330 = vsyncadd %s321, %s329
          %s331 = smul.addr %s27, 8
          %s332 = sadd.s32 %s26, %s331
          %s333 = smul.addr %s332, 128
          %s334 = scalar_lea.hbm %s3, %s333
          %s335 = sshll.u32 %s324, 4
          %s336 = int_to_ptr.vmem [resolvable:$true] %s335
          %341 = dma.vmem_to_hbm [thread:$0]  %s336, 1024, %s334, %s321, 128, 128, 8
        $region48: #{tpu_custom_call.1} parent=31 // pred_fallthru
          _
      $region32: #{tpu_custom_call.1} parent=5 // pred_fallthru
        _
      %p342 = scmp.le.s32.totalorder 2, %s17
      // Predicated region
      $region49: #{tpu_custom_call.1} parent=5 // pred_check
        %p343 = pneg %p342
      $region50: #{tpu_custom_call.1} parent=5 // pred_check_branch
        %345 = sbr.rel (%p343) target = $region52
      $region51: #{tpu_custom_call.1} parent=5 // pred_region
        %s346 = ssub.s32 %s17, 2
        // Predicated region
        $region53: #{tpu_custom_call.1} parent=51 // pred_check
          %p347 = pneg %p135
        $region54: #{tpu_custom_call.1} parent=51 // pred_check_branch
          %349 = sbr.rel (%p347) target = $region56
        $region55: #{tpu_custom_call.1} parent=51 // pred_region
          %s350 = sand.u32 %s120, 1
          %s351 = scalar_lea.sflag [#allocation4], %s350
          %s352 = sand.u32 %s120, 1
          %s353 = smul.addr %s352, 64
          %s354 = scalar_lea.vmem [#allocation9], %s353
          %355 = dma.done %s351, 1024
        $region56: #{tpu_custom_call.1} parent=51 // pred_fallthru
          _
      $region52: #{tpu_custom_call.1} parent=5 // pred_fallthru
        _
    $region6: #{tpu_custom_call.1} parent=1 // loop_footer
      %s21 = sadd.s32 1, %s17
    $region7: #{tpu_custom_call.1} parent=1 // loop_footer_branch
      %16 = sbr.rel target = $region3
    $region8: #{tpu_custom_call.1} parent=1 // loop_exit
      _
    %356 = vsyncpa [#allocation3], 1
    %s357 = scalar_lea.sflag [#allocation3], 1
    %358 = vsyncpa %s357, 1
    %359 = vsyncpa [#allocation8], 1
    %s360 = scalar_lea.sflag [#allocation8], 1
    %361 = vsyncpa %s360, 1
    %362 = vsyncpa [#allocation4], 1
    %s363 = scalar_lea.sflag [#allocation4], 1
    %364 = vsyncpa %s363, 1
    %365 = vsyncpa [#allocation5], 1
    %s366 = scalar_lea.sflag [#allocation5], 1
    %367 = vsyncpa %s366, 1

</llo_original>
